<compile_context>
chip_gen: v5e
topology: v5e:2x2
jax: 0.10.0
libtpu: 0.0.40
codegen_flags: <defaults>
</compile_context>

<pallas_src>
import functools

import numpy as np
import jax
import jax.numpy as jnp
from jax.experimental import pallas as pl
from jax.experimental.pallas import tpu as pltpu

NUM_SIZES = 4            # sizes = (1, 2, 4, 8)
SIZES = (1, 2, 4, 8)
EPS = 1e-5


# --------------------------------------------------------------------------
# Fused kernel: 4 FAM blocks + 3x3 conv + BN + ReLU for Nb images per step.
# Row space: r = c * Nb + n  (channel-major over the Nb-image stack).
# --------------------------------------------------------------------------
def fam_fused_kernel(x_ref, wmix_ref, bmix_ref, pcat_ref, pmask_ref, ucat_ref,
                     tmask_ref, wconv_ref, cbias_ref, out_ref, pmat_scr,
                     *, W, hw, rows):
    R = rows                                                     # Cb * Nb

    # x block is (C, Nb, HW); merge leading dims -> (C*Nb, HW)  (free reshape,
    # Nb is a sublane-group multiple in the tuned path).
    x2d = x_ref[...].reshape(-1, hw)

    # (1) all four folded 1x1 mixes (+bias, commutes with avg-pool) for the
    #     whole image stack: ONE MXU matmul with the kron-expanded weights.
    mixed = (jnp.dot(wmix_ref[...], x2d, preferred_element_type=jnp.float32)
             + bmix_ref[...])                                    # (4R, HW)

    # (2) block s=1: pool(1) and same-size bilinear upsample are identities.
    acc = jnp.maximum(mixed[:R, :], 0.0)                         # (R, HW)

    # (3) blocks s=2,4,8: ONE pool matmul against [pm2|pm4|pm8], constant
    #     lane-mask select per block, ReLU, then ONE upsample matmul against
    #     [um2;um4;um8] which also performs the 3-way add.
    pooled = jnp.dot(mixed[R:, :], pcat_ref[...],
                     preferred_element_type=jnp.float32)         # (3R, Lp)
    sel = (pooled[0:R] * pmask_ref[0:1, :]
           + pooled[R:2 * R] * pmask_ref[1:2, :]
           + pooled[2 * R:3 * R] * pmask_ref[2:3, :])            # (R, Lp)
    act = jnp.maximum(sel, 0.0)
    x_add = acc + jnp.dot(act, ucat_ref[...],
                          preferred_element_type=jnp.float32)    # (R, HW)

    # (4) 3x3 conv (padding=1) + folded BN + ReLU as im2col matmul.
    #     9 XLU lane-rolls + host-precomputed boundary masks written into a
    #     persistent VMEM scratch, then ONE matmul with kron(wconv, I_Nb).
    t = 0
    for dy in (-1, 0, 1):
        for dx in (-1, 0, 1):
            d = dy * W + dx
            if d == 0:
                pmat_scr[t * R:(t + 1) * R, :] = x_add
            else:
                sh = pltpu.roll(x_add, (-d) % hw, axis=1)
                pmat_scr[t * R:(t + 1) * R, :] = sh * tmask_ref[t:t + 1, :]
            t += 1
    conv = jnp.dot(wconv_ref[...], pmat_scr[...],
                   preferred_element_type=jnp.float32)           # (Co*Nb, HW)
    res = jnp.maximum(conv + cbias_ref[...], 0.0)
    out_ref[...] = res.reshape(out_ref.shape).astype(out_ref.dtype)


# --------------------------------------------------------------------------
# Host-side helpers: 1-D pooling / align_corners bilinear-upsample operators.
# --------------------------------------------------------------------------
def _avgpool_matrix(n, s):
    npool = n // s
    m = np.zeros((npool, n), np.float32)
    for p in range(npool):
        m[p, p * s:(p + 1) * s] = 1.0 / s
    return m


def _upsample_matrix(n, npool):
    # F.interpolate(mode='bilinear', align_corners=True) along one axis.
    m = np.zeros((n, npool), np.float32)
    if npool == 1:
        m[:, 0] = 1.0
    else:
        scale = (npool - 1) / (n - 1)
        for i in range(n):
            src = i * scale
            lo = min(int(np.floor(src)), npool - 2)
            frac = src - lo
            m[i, lo] += 1.0 - frac
            m[i, lo + 1] += frac
    return m


@functools.lru_cache(maxsize=None)
def _spatial_operators(H, W):
    """Weight-independent constants, cached on (H, W)."""
    HW = H * W
    pool_cols, up_rows, seg = [], [], []
    for s in SIZES[1:]:
        ph = _avgpool_matrix(H, s)
        pw = _avgpool_matrix(W, s)
        uh = _upsample_matrix(H, H // s)
        uw = _upsample_matrix(W, W // s)
        pool_cols.append(np.kron(ph.T, pw.T))        # (HW, HW/s^2)
        up_rows.append(np.kron(uh, uw).T)            # (HW/s^2, HW)
        seg.append((H // s) * (W // s))
    pcat = np.concatenate(pool_cols, axis=1).astype(np.float32)   # (HW, Lp)
    ucat = np.concatenate(up_rows, axis=0).astype(np.float32)     # (Lp, HW)
    Lp = pcat.shape[1]
    pmask = np.zeros((3, Lp), np.float32)
    off = 0
    for k, n in enumerate(seg):
        pmask[k, off:off + n] = 1.0
        off += n
    # 3x3 zero-padding boundary masks, tap order (dy, dx) row-major.
    yy = np.arange(HW) // W
    xx = np.arange(HW) % W
    tmask = np.zeros((9, HW), np.float32)
    t = 0
    for dy in (-1, 0, 1):
        for dx in (-1, 0, 1):
            tmask[t] = ((yy + dy >= 0) & (yy + dy < H) &
                        (xx + dx >= 0) & (xx + dx < W)).astype(np.float32)
            t += 1
    return pcat, ucat, pmask, tmask


# --------------------------------------------------------------------------
# Wrapper
# --------------------------------------------------------------------------
def fam_module_forward(x, fold_w, fold_b, wk, sc, bi):
    """fold_w: (4, Cb, C)  folded 1x1 conv weights (BN absorbed)
       fold_b: (4, Cb)     folded 1x1 conv biases
       wk:     (Co, Cb, 3, 3) 3x3 conv weights
       sc, bi: (Co,)       folded BN scale / bias of the final Conv2dReLU."""
    N, C, H, W = x.shape
    HW = H * W
    Cb = fold_w.shape[1]
    Co = wk.shape[0]

    # ---- images per grid step: fill >=8 sublanes in the matmul M dim, but
    #      keep at least 2 grid steps (v7x has 2 TensorCores). ----
    nb = max(1, -(-8 // Cb))
    nb = min(nb, N)
    if N >= 2:
        nb = min(nb, (N + 1) // 2)
    G = -(-N // nb)
    N_pad = G * nb
    R = Cb * nb

    # ---- structural (weight-independent) operators, cached on (H, W) ----
    pcat_np, ucat_np, pmask_np, tmask_np = _spatial_operators(H, W)
    Lp = pcat_np.shape[1]
    pcat = jnp.asarray(pcat_np)
    ucat = jnp.asarray(ucat_np)
    pmask = jnp.asarray(pmask_np)
    tmask = jnp.asarray(tmask_np)

    # ---- fold parameters and kron-expand them over the Nb-image stack ----
    eye_nb = jnp.eye(nb, dtype=jnp.float32)
    wmix = fold_w.reshape(NUM_SIZES * Cb, C).astype(jnp.float32)
    wmix_big = jnp.kron(wmix, eye_nb)                              # (4Cb*nb, C*nb)
    bmix_rows = jnp.repeat(fold_b.reshape(-1).astype(jnp.float32), nb)[:, None]
    wconv = (wk * sc[:, None, None, None]).transpose(0, 2, 3, 1)
    wconv = wconv.reshape(Co, 9 * Cb).astype(jnp.float32)          # cols: (tap, c)
    wconv_big = jnp.kron(wconv, eye_nb)                            # (Co*nb, 9Cb*nb)
    cbias_rows = jnp.repeat(bi.astype(jnp.float32), nb)[:, None]   # (Co*nb, 1)

    # ---- channel-major lane-dense image stack: (C, N, HW), rows = c*nb+n ----
    x_t = x.reshape(N, C, HW).transpose(1, 0, 2).astype(jnp.float32)
    if N_pad != N:
        x_t = jnp.pad(x_t, ((0, 0), (0, N_pad - N), (0, 0)))

    def const_spec(a):
        return pl.BlockSpec(a.shape, lambda g: (0, 0))

    flops = 2 * G * ((4 * R) * (C * nb) * HW        # 1x1 mixes
                     + (3 * R) * HW * Lp            # fused pool
                     + R * Lp * HW                  # fused upsample (+adds)
                     + (Co * nb) * (9 * R) * HW)    # 3x3 conv
    bytes_accessed = 4 * (int(x_t.size) + N_pad * Co * HW)

    conv_flat = pl.pallas_call(
        functools.partial(fam_fused_kernel, W=W, hw=HW, rows=R),
        out_shape=jax.ShapeDtypeStruct((Co, N_pad, HW), jnp.float32),
        grid=(G,),
        in_specs=[pl.BlockSpec((C, nb, HW), lambda g: (0, g, 0)),
                  const_spec(wmix_big), const_spec(bmix_rows),
                  const_spec(pcat), const_spec(pmask), const_spec(ucat),
                  const_spec(tmask), const_spec(wconv_big),
                  const_spec(cbias_rows)],
        out_specs=pl.BlockSpec((Co, nb, HW), lambda g: (0, g, 0)),
        scratch_shapes=[pltpu.VMEM((9 * R, HW), jnp.float32)],
        compiler_params=pltpu.CompilerParams(
            dimension_semantics=("parallel",),
            vmem_limit_bytes=32 * 1024 * 1024),
        cost_estimate=pl.CostEstimate(flops=int(flops), transcendentals=0,
                                      bytes_accessed=int(bytes_accessed)),
    )(x_t, wmix_big, bmix_rows, pcat, pmask, ucat, tmask, wconv_big, cbias_rows)

    conv_out = conv_flat[:, :N, :].transpose(1, 0, 2).reshape(N, Co, H, W)
    # FAMModule.forward returns the INPUT x; conv_out is computed but unused
    # by the original PyTorch code -- returned so the kernel work is checkable.
    return x, conv_out


# --------------------------------------------------------------------------
# Pure-JAX reference for verification.
# --------------------------------------------------------------------------
def reference_forward(x, fold_w, fold_b, wk, sc, bi):
    N, C, H, W = x.shape
    Cb = fold_w.shape[1]
    x_add = jnp.zeros((N, Cb, H, W), jnp.float32)
    for k, s in enumerate(SIZES):
        pooled = jax.lax.reduce_window(
            x, 0.0, jax.lax.add, (1, 1, s, s), (1, 1, s, s), 'VALID')
        pooled = pooled / float(s * s)
        y = jnp.einsum('oc,nchw->nohw', fold_w[k], pooled)
        act = jnp.maximum(y + fold_b[k][None, :, None, None], 0.0)
        uh = jnp.asarray(_upsample_matrix(H, H // s))
        uw = jnp.asarray(_upsample_matrix(W, W // s))
        up = jnp.einsum('hp,nopq->nohq', uh, act)
        up = jnp.einsum('nohq,wq->nohw', up, uw)
        x_add = x_add + up
    conv = jax.lax.conv_general_dilated(
        x_add, wk, window_strides=(1, 1), padding=((1, 1), (1, 1)),
        dimension_numbers=('NCHW', 'OIHW', 'NCHW'))
    conv = jnp.maximum(conv * sc[None, :, None, None] +
                       bi[None, :, None, None], 0.0)
    return x, conv


if __name__ == "__main__":
    # Config consistent with FAMModule(in_channels=4, out_channel=4).
    # Batch 16 so each grid step stacks 8 images (fills the sublane/M dim)
    # while keeping a 2-wide parallel grid for v7x's dual TensorCores.
    N, C, H, W = 16, 4, 16, 16
    Cb = C // NUM_SIZES          # per-block output channels (= 1)
    Co = 4                       # out_channel of the final Conv2dReLU

    key = jax.random.PRNGKey(0)
    k_x, k_p = jax.random.split(key)
    x = jax.random.normal(k_x, (N, C, H, W), jnp.float32)

    # ---- deterministic parameters (BatchNorm folded as eval-mode affine) ----
    pkeys = jax.random.split(k_p, NUM_SIZES + 1)
    fold_w, fold_b = [], []
    for i, s in enumerate(SIZES):
        kw, kb, kg, kbe, km, kv = jax.random.split(pkeys[i], 6)
        w1 = jax.random.normal(kw, (Cb, C), jnp.float32) * 0.3
        if s == 1:   # pool_size==1 -> use_batchnorm=False -> conv has a bias
            bias = jax.random.normal(kb, (Cb,), jnp.float32) * 0.1
            fold_w.append(w1)
            fold_b.append(bias)
        else:        # conv(bias=False) + BatchNorm folded
            gamma = 1.0 + 0.1 * jax.random.normal(kg, (Cb,), jnp.float32)
            beta = 0.1 * jax.random.normal(kbe, (Cb,), jnp.float32)
            mean = 0.1 * jax.random.normal(km, (Cb,), jnp.float32)
            var = 0.5 + jnp.abs(jax.random.normal(kv, (Cb,), jnp.float32))
            a = gamma / jnp.sqrt(var + EPS)
            fold_w.append(w1 * a[:, None])
            fold_b.append(beta - mean * a)
    fold_w = jnp.stack(fold_w)                       # (4, Cb, C)
    fold_b = jnp.stack(fold_b)                       # (4, Cb)

    kw, kg, kbe, km, kv = jax.random.split(pkeys[-1], 5)
    wk = jax.random.normal(kw, (Co, Cb, 3, 3), jnp.float32) * 0.3
    gamma = 1.0 + 0.1 * jax.random.normal(kg, (Co,), jnp.float32)
    beta = 0.1 * jax.random.normal(kbe, (Co,), jnp.float32)
    mean = 0.1 * jax.random.normal(km, (Co,), jnp.float32)
    var = 0.5 + jnp.abs(jax.random.normal(kv, (Co,), jnp.float32))
    sc = gamma / jnp.sqrt(var + EPS)                 # (Co,)
    bi = beta - mean * sc                            # (Co,)

    out_x, conv_out = fam_module_forward(x, fold_w, fold_b, wk, sc, bi)
    jax.block_until_ready(out_x)
    jax.block_until_ready(conv_out)

    ref_x, ref_conv = reference_forward(x, fold_w, fold_b, wk, sc, bi)

    np.testing.assert_allclose(np.asarray(out_x), np.asarray(ref_x),
                               rtol=1e-5, atol=1e-5)
    np.testing.assert_allclose(np.asarray(conv_out), np.asarray(ref_conv),
                               rtol=1e-4, atol=1e-4)
    print("KERNEL_OK")
</pallas_src>

<mosaic_0001>
module attributes {stable_mosaic.version = 11 : i64} {
  func.func @fam_fused_kernel(%arg0: i32, %arg1: memref<4x8x256xf32, #tpu.memory_space<vmem>>, %arg2: memref<32x32xf32, #tpu.memory_space<vmem>>, %arg3: memref<32x1xf32, #tpu.memory_space<vmem>>, %arg4: memref<256x84xf32, #tpu.memory_space<vmem>>, %arg5: memref<3x84xf32, #tpu.memory_space<vmem>>, %arg6: memref<84x256xf32, #tpu.memory_space<vmem>>, %arg7: memref<9x256xf32, #tpu.memory_space<vmem>>, %arg8: memref<32x72xf32, #tpu.memory_space<vmem>>, %arg9: memref<32x1xf32, #tpu.memory_space<vmem>>, %arg10: memref<4x8x256xf32, #tpu.memory_space<vmem>>, %arg11: memref<72x256xf32, #tpu.memory_space<vmem>>) attributes {dimension_semantics = [#tpu.dimension_semantics<parallel>], iteration_bounds = array<i64: 2>, scalar_prefetch = 0 : i64, scratch_operands = 1 : i64, tpu.core_type = #tpu.core_type<tc>, window_params = [{transform_indices = @transform_0, window_bounds = array<i64: 4, 8, 256>}, {pipeline_mode = #tpu.pipeline_mode<synchronous>, transform_indices = @transform_1, window_bounds = array<i64: 32, 32>}, {pipeline_mode = #tpu.pipeline_mode<synchronous>, transform_indices = @transform_2, window_bounds = array<i64: 32, 1>}, {pipeline_mode = #tpu.pipeline_mode<synchronous>, transform_indices = @transform_3, window_bounds = array<i64: 256, 84>}, {pipeline_mode = #tpu.pipeline_mode<synchronous>, transform_indices = @transform_4, window_bounds = array<i64: 3, 84>}, {pipeline_mode = #tpu.pipeline_mode<synchronous>, transform_indices = @transform_5, window_bounds = array<i64: 84, 256>}, {pipeline_mode = #tpu.pipeline_mode<synchronous>, transform_indices = @transform_6, window_bounds = array<i64: 9, 256>}, {pipeline_mode = #tpu.pipeline_mode<synchronous>, transform_indices = @transform_7, window_bounds = array<i64: 32, 72>}, {pipeline_mode = #tpu.pipeline_mode<synchronous>, transform_indices = @transform_8, window_bounds = array<i64: 32, 1>}, {transform_indices = @transform_9, window_bounds = array<i64: 4, 8, 256>}]} {
    %c0 = arith.constant 0 : index
    %c0_0 = arith.constant 0 : index
    %c0_1 = arith.constant 0 : index
    %0 = vector.load %arg1[%c0, %c0_0, %c0_1] : memref<4x8x256xf32, #tpu.memory_space<vmem>>, vector<4x8x256xf32>
    %1 = vector.shape_cast %0 : vector<4x8x256xf32> to vector<32x256xf32>
    %c0_2 = arith.constant 0 : index
    %c0_3 = arith.constant 0 : index
    %2 = vector.load %arg2[%c0_2, %c0_3] : memref<32x32xf32, #tpu.memory_space<vmem>>, vector<32x32xf32>
    %cst = arith.constant dense<0.000000e+00> : vector<32x256xf32>
    %3 = tpu.matmul %2, %1, %cst {dimension_numbers = #tpu.dot_dimension_numbers<[1], [0], [0], [1], [0, 0, 1, 1], [], []>} : vector<32x32xf32>, vector<32x256xf32>, vector<32x256xf32> -> vector<32x256xf32>
    %c0_4 = arith.constant 0 : index
    %c0_5 = arith.constant 0 : index
    %4 = vector.load %arg3[%c0_4, %c0_5] : memref<32x1xf32, #tpu.memory_space<vmem>>, vector<32x1xf32>
    %5 = vector.broadcast %4 : vector<32x1xf32> to vector<32x256xf32>
    %6 = arith.addf %3, %5 : vector<32x256xf32>
    %7 = vector.extract_strided_slice %6 {offsets = [0, 0], sizes = [8, 256], strides = [1, 1]} : vector<32x256xf32> to vector<8x256xf32>
    %cst_6 = arith.constant 0.000000e+00 : f32
    %8 = vector.broadcast %cst_6 : f32 to vector<8x256xf32>
    %9 = arith.maximumf %7, %8 : vector<8x256xf32>
    %10 = vector.extract_strided_slice %6 {offsets = [8, 0], sizes = [24, 256], strides = [1, 1]} : vector<32x256xf32> to vector<24x256xf32>
    %c0_7 = arith.constant 0 : index
    %c0_8 = arith.constant 0 : index
    %11 = vector.load %arg4[%c0_7, %c0_8] : memref<256x84xf32, #tpu.memory_space<vmem>>, vector<256x84xf32>
    %cst_9 = arith.constant dense<0.000000e+00> : vector<24x84xf32>
    %12 = tpu.matmul %10, %11, %cst_9 {dimension_numbers = #tpu.dot_dimension_numbers<[1], [0], [0], [1], [0, 0, 1, 1], [], []>} : vector<24x256xf32>, vector<256x84xf32>, vector<24x84xf32> -> vector<24x84xf32>
    %13 = vector.extract_strided_slice %12 {offsets = [0, 0], sizes = [8, 84], strides = [1, 1]} : vector<24x84xf32> to vector<8x84xf32>
    %c0_10 = arith.constant 0 : index
    %c0_11 = arith.constant 0 : index
    %14 = vector.load %arg5[%c0_10, %c0_11] : memref<3x84xf32, #tpu.memory_space<vmem>>, vector<1x84xf32>
    %15 = vector.broadcast %14 : vector<1x84xf32> to vector<8x84xf32>
    %16 = arith.mulf %13, %15 : vector<8x84xf32>
    %17 = vector.extract_strided_slice %12 {offsets = [8, 0], sizes = [8, 84], strides = [1, 1]} : vector<24x84xf32> to vector<8x84xf32>
    %c1 = arith.constant 1 : index
    %c0_12 = arith.constant 0 : index
    %18 = vector.load %arg5[%c1, %c0_12] : memref<3x84xf32, #tpu.memory_space<vmem>>, vector<1x84xf32>
    %19 = vector.broadcast %18 : vector<1x84xf32> to vector<8x84xf32>
    %20 = arith.mulf %17, %19 : vector<8x84xf32>
    %21 = arith.addf %16, %20 : vector<8x84xf32>
    %22 = vector.extract_strided_slice %12 {offsets = [16, 0], sizes = [8, 84], strides = [1, 1]} : vector<24x84xf32> to vector<8x84xf32>
    %c2 = arith.constant 2 : index
    %c0_13 = arith.constant 0 : index
    %23 = vector.load %arg5[%c2, %c0_13] : memref<3x84xf32, #tpu.memory_space<vmem>>, vector<1x84xf32>
    %24 = vector.broadcast %23 : vector<1x84xf32> to vector<8x84xf32>
    %25 = arith.mulf %22, %24 : vector<8x84xf32>
    %26 = arith.addf %21, %25 : vector<8x84xf32>
    %cst_14 = arith.constant 0.000000e+00 : f32
    %27 = vector.broadcast %cst_14 : f32 to vector<8x84xf32>
    %28 = arith.maximumf %26, %27 : vector<8x84xf32>
    %c0_15 = arith.constant 0 : index
    %c0_16 = arith.constant 0 : index
    %29 = vector.load %arg6[%c0_15, %c0_16] : memref<84x256xf32, #tpu.memory_space<vmem>>, vector<84x256xf32>
    %cst_17 = arith.constant dense<0.000000e+00> : vector<8x256xf32>
    %30 = tpu.matmul %28, %29, %cst_17 {dimension_numbers = #tpu.dot_dimension_numbers<[1], [0], [0], [1], [0, 0, 1, 1], [], []>} : vector<8x84xf32>, vector<84x256xf32>, vector<8x256xf32> -> vector<8x256xf32>
    %31 = arith.addf %9, %30 : vector<8x256xf32>
    %c17_i32 = arith.constant 17 : i32
    %32 = tpu.dynamic_rotate %31 by %c17_i32 dim 1 : vector<8x256xf32>, i32 -> vector<8x256xf32>
    %c0_18 = arith.constant 0 : index
    %c0_19 = arith.constant 0 : index
    %33 = vector.load %arg7[%c0_18, %c0_19] : memref<9x256xf32, #tpu.memory_space<vmem>>, vector<1x256xf32>
    %34 = vector.broadcast %33 : vector<1x256xf32> to vector<8x256xf32>
    %35 = arith.mulf %32, %34 : vector<8x256xf32>
    %c0_20 = arith.constant 0 : index
    %c0_21 = arith.constant 0 : index
    %36 = vector.load %arg11[%c0_20, %c0_21] : memref<72x256xf32, #tpu.memory_space<vmem>>, vector<8x256xf32>
    tpu.vector_store %arg11[%c0_20, %c0_21], %35 {strides = array<i32>} : memref<72x256xf32, #tpu.memory_space<vmem>>, vector<8x256xf32>,
    %c16_i32 = arith.constant 16 : i32
    %37 = tpu.dynamic_rotate %31 by %c16_i32 dim 1 : vector<8x256xf32>, i32 -> vector<8x256xf32>
    %c1_22 = arith.constant 1 : index
    %c0_23 = arith.constant 0 : index
    %38 = vector.load %arg7[%c1_22, %c0_23] : memref<9x256xf32, #tpu.memory_space<vmem>>, vector<1x256xf32>
    %39 = vector.broadcast %38 : vector<1x256xf32> to vector<8x256xf32>
    %40 = arith.mulf %37, %39 : vector<8x256xf32>
    %c8 = arith.constant 8 : index
    %c0_24 = arith.constant 0 : index
    %41 = vector.load %arg11[%c8, %c0_24] : memref<72x256xf32, #tpu.memory_space<vmem>>, vector<8x256xf32>
    tpu.vector_store %arg11[%c8, %c0_24], %40 {strides = array<i32>} : memref<72x256xf32, #tpu.memory_space<vmem>>, vector<8x256xf32>,
    %c15_i32 = arith.constant 15 : i32
    %42 = tpu.dynamic_rotate %31 by %c15_i32 dim 1 : vector<8x256xf32>, i32 -> vector<8x256xf32>
    %c2_25 = arith.constant 2 : index
    %c0_26 = arith.constant 0 : index
    %43 = vector.load %arg7[%c2_25, %c0_26] : memref<9x256xf32, #tpu.memory_space<vmem>>, vector<1x256xf32>
    %44 = vector.broadcast %43 : vector<1x256xf32> to vector<8x256xf32>
    %45 = arith.mulf %42, %44 : vector<8x256xf32>
    %c16 = arith.constant 16 : index
    %c0_27 = arith.constant 0 : index
    %46 = vector.load %arg11[%c16, %c0_27] : memref<72x256xf32, #tpu.memory_space<vmem>>, vector<8x256xf32>
    tpu.vector_store %arg11[%c16, %c0_27], %45 {strides = array<i32>} : memref<72x256xf32, #tpu.memory_space<vmem>>, vector<8x256xf32>,
    %c1_i32 = arith.constant 1 : i32
    %47 = tpu.dynamic_rotate %31 by %c1_i32 dim 1 : vector<8x256xf32>, i32 -> vector<8x256xf32>
    %c3 = arith.constant 3 : index
    %c0_28 = arith.constant 0 : index
    %48 = vector.load %arg7[%c3, %c0_28] : memref<9x256xf32, #tpu.memory_space<vmem>>, vector<1x256xf32>
    %49 = vector.broadcast %48 : vector<1x256xf32> to vector<8x256xf32>
    %50 = arith.mulf %47, %49 : vector<8x256xf32>
    %c24 = arith.constant 24 : index
    %c0_29 = arith.constant 0 : index
    %51 = vector.load %arg11[%c24, %c0_29] : memref<72x256xf32, #tpu.memory_space<vmem>>, vector<8x256xf32>
    tpu.vector_store %arg11[%c24, %c0_29], %50 {strides = array<i32>} : memref<72x256xf32, #tpu.memory_space<vmem>>, vector<8x256xf32>,
    %c32 = arith.constant 32 : index
    %c0_30 = arith.constant 0 : index
    %52 = vector.load %arg11[%c32, %c0_30] : memref<72x256xf32, #tpu.memory_space<vmem>>, vector<8x256xf32>
    tpu.vector_store %arg11[%c32, %c0_30], %31 {strides = array<i32>} : memref<72x256xf32, #tpu.memory_space<vmem>>, vector<8x256xf32>,
    %c255_i32 = arith.constant 255 : i32
    %53 = tpu.dynamic_rotate %31 by %c255_i32 dim 1 : vector<8x256xf32>, i32 -> vector<8x256xf32>
    %c5 = arith.constant 5 : index
    %c0_31 = arith.constant 0 : index
    %54 = vector.load %arg7[%c5, %c0_31] : memref<9x256xf32, #tpu.memory_space<vmem>>, vector<1x256xf32>
    %55 = vector.broadcast %54 : vector<1x256xf32> to vector<8x256xf32>
    %56 = arith.mulf %53, %55 : vector<8x256xf32>
    %c40 = arith.constant 40 : index
    %c0_32 = arith.constant 0 : index
    %57 = vector.load %arg11[%c40, %c0_32] : memref<72x256xf32, #tpu.memory_space<vmem>>, vector<8x256xf32>
    tpu.vector_store %arg11[%c40, %c0_32], %56 {strides = array<i32>} : memref<72x256xf32, #tpu.memory_space<vmem>>, vector<8x256xf32>,
    %c241_i32 = arith.constant 241 : i32
    %58 = tpu.dynamic_rotate %31 by %c241_i32 dim 1 : vector<8x256xf32>, i32 -> vector<8x256xf32>
    %c6 = arith.constant 6 : index
    %c0_33 = arith.constant 0 : index
    %59 = vector.load %arg7[%c6, %c0_33] : memref<9x256xf32, #tpu.memory_space<vmem>>, vector<1x256xf32>
    %60 = vector.broadcast %59 : vector<1x256xf32> to vector<8x256xf32>
    %61 = arith.mulf %58, %60 : vector<8x256xf32>
    %c48 = arith.constant 48 : index
    %c0_34 = arith.constant 0 : index
    %62 = vector.load %arg11[%c48, %c0_34] : memref<72x256xf32, #tpu.memory_space<vmem>>, vector<8x256xf32>
    tpu.vector_store %arg11[%c48, %c0_34], %61 {strides = array<i32>} : memref<72x256xf32, #tpu.memory_space<vmem>>, vector<8x256xf32>,
    %c240_i32 = arith.constant 240 : i32
    %63 = tpu.dynamic_rotate %31 by %c240_i32 dim 1 : vector<8x256xf32>, i32 -> vector<8x256xf32>
    %c7 = arith.constant 7 : index
    %c0_35 = arith.constant 0 : index
    %64 = vector.load %arg7[%c7, %c0_35] : memref<9x256xf32, #tpu.memory_space<vmem>>, vector<1x256xf32>
    %65 = vector.broadcast %64 : vector<1x256xf32> to vector<8x256xf32>
    %66 = arith.mulf %63, %65 : vector<8x256xf32>
    %c56 = arith.constant 56 : index
    %c0_36 = arith.constant 0 : index
    %67 = vector.load %arg11[%c56, %c0_36] : memref<72x256xf32, #tpu.memory_space<vmem>>, vector<8x256xf32>
    tpu.vector_store %arg11[%c56, %c0_36], %66 {strides = array<i32>} : memref<72x256xf32, #tpu.memory_space<vmem>>, vector<8x256xf32>,
    %c239_i32 = arith.constant 239 : i32
    %68 = tpu.dynamic_rotate %31 by %c239_i32 dim 1 : vector<8x256xf32>, i32 -> vector<8x256xf32>
    %c8_37 = arith.constant 8 : index
    %c0_38 = arith.constant 0 : index
    %69 = vector.load %arg7[%c8_37, %c0_38] : memref<9x256xf32, #tpu.memory_space<vmem>>, vector<1x256xf32>
    %70 = vector.broadcast %69 : vector<1x256xf32> to vector<8x256xf32>
    %71 = arith.mulf %68, %70 : vector<8x256xf32>
    %c64 = arith.constant 64 : index
    %c0_39 = arith.constant 0 : index
    %72 = vector.load %arg11[%c64, %c0_39] : memref<72x256xf32, #tpu.memory_space<vmem>>, vector<8x256xf32>
    tpu.vector_store %arg11[%c64, %c0_39], %71 {strides = array<i32>} : memref<72x256xf32, #tpu.memory_space<vmem>>, vector<8x256xf32>,
    %c0_40 = arith.constant 0 : index
    %c0_41 = arith.constant 0 : index
    %73 = vector.load %arg8[%c0_40, %c0_41] : memref<32x72xf32, #tpu.memory_space<vmem>>, vector<32x72xf32>
    %c0_42 = arith.constant 0 : index
    %c0_43 = arith.constant 0 : index
    %74 = vector.load %arg11[%c0_42, %c0_43] : memref<72x256xf32, #tpu.memory_space<vmem>>, vector<72x256xf32>
    %cst_44 = arith.constant dense<0.000000e+00> : vector<32x256xf32>
    %75 = tpu.matmul %73, %74, %cst_44 {dimension_numbers = #tpu.dot_dimension_numbers<[1], [0], [0], [1], [0, 0, 1, 1], [], []>} : vector<32x72xf32>, vector<72x256xf32>, vector<32x256xf32> -> vector<32x256xf32>
    %c0_45 = arith.constant 0 : index
    %c0_46 = arith.constant 0 : index
    %76 = vector.load %arg9[%c0_45, %c0_46] : memref<32x1xf32, #tpu.memory_space<vmem>>, vector<32x1xf32>
    %77 = vector.broadcast %76 : vector<32x1xf32> to vector<32x256xf32>
    %78 = arith.addf %75, %77 : vector<32x256xf32>
    %cst_47 = arith.constant 0.000000e+00 : f32
    %79 = vector.broadcast %cst_47 : f32 to vector<32x256xf32>
    %80 = arith.maximumf %78, %79 : vector<32x256xf32>
    %81 = vector.shape_cast %80 : vector<32x256xf32> to vector<4x8x256xf32>
    %c0_48 = arith.constant 0 : index
    %c0_49 = arith.constant 0 : index
    %c0_50 = arith.constant 0 : index
    %82 = vector.load %arg10[%c0_48, %c0_49, %c0_50] : memref<4x8x256xf32, #tpu.memory_space<vmem>>, vector<4x8x256xf32>
    tpu.vector_store %arg10[%c0_48, %c0_49, %c0_50], %81 {strides = array<i32>} : memref<4x8x256xf32, #tpu.memory_space<vmem>>, vector<4x8x256xf32>,
    return
  }
  func.func @transform_0(%arg0: i32) -> (i32, i32, i32) {
    %c0_i32 = arith.constant 0 : i32
    %c0_i32_0 = arith.constant 0 : i32
    %c0_i32_1 = arith.constant 0 : i32
    return %c0_i32, %arg0, %c0_i32_0 : i32, i32, i32
  }
  func.func @transform_1(%arg0: i32) -> (i32, i32) {
    %c0_i32 = arith.constant 0 : i32
    %c0_i32_0 = arith.constant 0 : i32
    %c0_i32_1 = arith.constant 0 : i32
    return %c0_i32, %c0_i32_0 : i32, i32
  }
  func.func @transform_2(%arg0: i32) -> (i32, i32) {
    %c0_i32 = arith.constant 0 : i32
    %c0_i32_0 = arith.constant 0 : i32
    %c0_i32_1 = arith.constant 0 : i32
    return %c0_i32, %c0_i32_0 : i32, i32
  }
  func.func @transform_3(%arg0: i32) -> (i32, i32) {
    %c0_i32 = arith.constant 0 : i32
    %c0_i32_0 = arith.constant 0 : i32
    %c0_i32_1 = arith.constant 0 : i32
    return %c0_i32, %c0_i32_0 : i32, i32
  }
  func.func @transform_4(%arg0: i32) -> (i32, i32) {
    %c0_i32 = arith.constant 0 : i32
    %c0_i32_0 = arith.constant 0 : i32
    %c0_i32_1 = arith.constant 0 : i32
    return %c0_i32, %c0_i32_0 : i32, i32
  }
  func.func @transform_5(%arg0: i32) -> (i32, i32) {
    %c0_i32 = arith.constant 0 : i32
    %c0_i32_0 = arith.constant 0 : i32
    %c0_i32_1 = arith.constant 0 : i32
    return %c0_i32, %c0_i32_0 : i32, i32
  }
  func.func @transform_6(%arg0: i32) -> (i32, i32) {
    %c0_i32 = arith.constant 0 : i32
    %c0_i32_0 = arith.constant 0 : i32
    %c0_i32_1 = arith.constant 0 : i32
    return %c0_i32, %c0_i32_0 : i32, i32
  }
  func.func @transform_7(%arg0: i32) -> (i32, i32) {
    %c0_i32 = arith.constant 0 : i32
    %c0_i32_0 = arith.constant 0 : i32
    %c0_i32_1 = arith.constant 0 : i32
    return %c0_i32, %c0_i32_0 : i32, i32
  }
  func.func @transform_8(%arg0: i32) -> (i32, i32) {
    %c0_i32 = arith.constant 0 : i32
    %c0_i32_0 = arith.constant 0 : i32
    %c0_i32_1 = arith.constant 0 : i32
    return %c0_i32, %c0_i32_0 : i32, i32
  }
  func.func @transform_9(%arg0: i32) -> (i32, i32, i32) {
    %c0_i32 = arith.constant 0 : i32
    %c0_i32_0 = arith.constant 0 : i32
    %c0_i32_1 = arith.constant 0 : i32
    return %c0_i32, %arg0, %c0_i32_0 : i32, i32, i32
  }
}

</mosaic_0001>

<llo_original>
// kernel: tpu_custom_call.1
$region0: #{tpu_custom_call.1}
  #allocation0 [shape = 'u32[]', space=smem, size = 0x4, offset = 0x4, fixed_abs, tag = 'smem constant byte address 0x4 - core index']
  #allocation1 [shape = 'u32[72,128]{1,0:T(1,128)}', space=vmem, size = 0x9000, scoped, tag = 'internal scratch']
  #allocation2 [shape = 'f32[72,256]{1,0:T(8,128)}', space=vmem, size = 0x12000, scoped, tag = 'scratch operand']
  %s0 = inlined_call_operand.vmem [shape: f32[4,16,256], index: 0, kind: input, shape index: {}]
  %s1 = inlined_call_operand.vmem [shape: f32[32,32], index: 1, kind: input, shape index: {}]
  %s2 = inlined_call_operand.vmem [shape: f32[32,1], index: 2, kind: input, shape index: {}]
  %s3 = inlined_call_operand.vmem [shape: f32[256,84], index: 3, kind: input, shape index: {}]
  %s4 = inlined_call_operand.vmem [shape: f32[3,84], index: 4, kind: input, shape index: {}]
  %s5 = inlined_call_operand.vmem [shape: f32[84,256], index: 5, kind: input, shape index: {}]
  %s6 = inlined_call_operand.vmem [shape: f32[9,256], index: 6, kind: input, shape index: {}]
  %s7 = inlined_call_operand.vmem [shape: f32[32,72], index: 7, kind: input, shape index: {}]
  %s8 = inlined_call_operand.vmem [shape: f32[32,1], index: 8, kind: input, shape index: {}]
  %s9 = inlined_call_operand.hbm [shape: f32[4,16,256], index: 9, kind: output, shape index: {}]
  %s10 = sld [smem:[#allocation0]]
  $region92: #{tpu_custom_call.1} parent=0
    _
  %s12 = ssub.s32 1, %s10
  %s13 = scalar_select 0, %s12, %s10
  $region1: #{tpu_custom_call.1} parent=0
    #allocation3 [shape = 'u8[65536]{0}', space=vmem, size = 0x10000, scoped, tag = 'input window, operand 0']
    #allocation4 [shape = 'u8[65536]{0}', space=vmem, size = 0x10000, scoped, tag = 'output window, operand 0']
    #allocation5 [shape = 's32[2]{0}', space=sflag, size = 0x8, scoped, tag = 'scoped memory for tpu_custom_call.1']
    %14 = vsyncpa [#allocation5], 0
    %s15 = scalar_lea.sflag [#allocation5], 1
    %16 = vsyncpa %s15, 0
    loop: start=0, step=1, limit=4
    $region2: #{tpu_custom_call.1} parent=1 // loop_pre_header
      _
    $region3: #{tpu_custom_call.1} parent=1 // loop_header
      %s18 = sphi 0, %s22
      %p19 = scmp.ge.s32.totalorder %s18, 4
      %s28 = sphi 0, %s30
      %s31 = sphi 0, %s28
      %s32 = sphi 0, %s31
      %s48 = sphi 0, %s32
      %s52 = sphi 0, %s52
      %s54 = sphi 0, %s52
      %s55 = sphi 0, %s54
      %s69 = sphi 0, %s55
      %s73 = sphi 0, %s73
      %s75 = sphi 0, %s73
      %s76 = sphi 0, %s75
      %s90 = sphi 0, %s76
      %s94 = sphi 0, %s94
      %s96 = sphi 0, %s94
      %s97 = sphi 0, %s96
      %s111 = sphi 0, %s97
      %s115 = sphi 0, %s115
      %s117 = sphi 0, %s115
      %s118 = sphi 0, %s117
      %s132 = sphi 0, %s118
      %s136 = sphi 0, %s136
      %s138 = sphi 0, %s136
      %s139 = sphi 0, %s138
      %s153 = sphi 0, %s139
      %s157 = sphi 0, %s157
      %s159 = sphi 0, %s157
      %s160 = sphi 0, %s159
      %s174 = sphi 0, %s160
      %s178 = sphi 0, %s178
      %s180 = sphi 0, %s178
      %s181 = sphi 0, %s180
      %s195 = sphi 0, %s181
      %s199 = sphi 0, %s199
      %s201 = sphi 0, %s199
      %s202 = sphi 0, %s201
      %s216 = sphi 0, %s202
      %s222 = sphi 0, %s224
      %s225 = sphi 0, %s222
      %s226 = sphi 0, %s225
      %s242 = sphi 0, %s226
    $region4: #{tpu_custom_call.1} parent=1 // loop_header_branch
      %21 = sbr.rel (%p19) target = $region8
    $region5: #{tpu_custom_call.1} parent=1 // loop_body
      %s23 = ssub.s32 %s18, 1
      %s24 = ssub.s32 %s18, 2
      %s25 = sadd.s32 %s18, 1
      %s26 = ssub.s32 %s18, %s25
      %p27 = scmp.eq.s32.totalorder %s26, 0
      %s29 = sadd.s32 %s28, 1
      %s30 = scalar_select %p27, %s28, %s29
      %p33 = pneg %p27
      %p34 = scmp.eq.s32.totalorder %s18, 1
      %p35 = por %p33, %p34
      %p36 = scmp.ne.s32.totalorder %s28, %s31
      %p37 = scmp.eq.s32.totalorder %s18, 0
      %p38 = por %p36, %p37
      %p39 = scmp.ne.s32.totalorder %s28, %s31
      %p40 = scmp.eq.s32.totalorder %s23, 1
      %p41 = por %p39, %p40
      %p42 = scmp.ne.s32.totalorder %s31, %s32
      %p43 = scmp.eq.s32.totalorder %s23, 0
      %p44 = por %p42, %p43
      %p45 = scmp.ne.s32.totalorder %s31, %s32
      %p46 = scmp.eq.s32.totalorder %s24, 1
      %p47 = por %p45, %p46
      %p49 = scmp.ne.s32.totalorder %s32, %s48
      %p50 = scmp.eq.s32.totalorder %s24, 0
      %p51 = por %p49, %p50
      %s53 = sadd.s32 %s52, 1
      %p56 = scmp.eq.s32.totalorder %s18, 1
      %p57 = scmp.ne.s32.totalorder %s52, %s54
      %p58 = scmp.eq.s32.totalorder %s18, 0
      %p59 = por %p57, %p58
      %p60 = scmp.ne.s32.totalorder %s52, %s54
      %p61 = scmp.eq.s32.totalorder %s23, 1
      %p62 = por %p60, %p61
      %p63 = scmp.ne.s32.totalorder %s54, %s55
      %p64 = scmp.eq.s32.totalorder %s23, 0
      %p65 = por %p63, %p64
      %p66 = scmp.ne.s32.totalorder %s54, %s55
      %p67 = scmp.eq.s32.totalorder %s24, 1
      %p68 = por %p66, %p67
      %p70 = scmp.ne.s32.totalorder %s55, %s69
      %p71 = scmp.eq.s32.totalorder %s24, 0
      %p72 = por %p70, %p71
      %s74 = sadd.s32 %s73, 1
      %p77 = scmp.eq.s32.totalorder %s18, 1
      %p78 = scmp.ne.s32.totalorder %s73, %s75
      %p79 = scmp.eq.s32.totalorder %s18, 0
      %p80 = por %p78, %p79
      %p81 = scmp.ne.s32.totalorder %s73, %s75
      %p82 = scmp.eq.s32.totalorder %s23, 1
      %p83 = por %p81, %p82
      %p84 = scmp.ne.s32.totalorder %s75, %s76
      %p85 = scmp.eq.s32.totalorder %s23, 0
      %p86 = por %p84, %p85
      %p87 = scmp.ne.s32.totalorder %s75, %s76
      %p88 = scmp.eq.s32.totalorder %s24, 1
      %p89 = por %p87, %p88
      %p91 = scmp.ne.s32.totalorder %s76, %s90
      %p92 = scmp.eq.s32.totalorder %s24, 0
      %p93 = por %p91, %p92
      %s95 = sadd.s32 %s94, 1
      %p98 = scmp.eq.s32.totalorder %s18, 1
      %p99 = scmp.ne.s32.totalorder %s94, %s96
      %p100 = scmp.eq.s32.totalorder %s18, 0
      %p101 = por %p99, %p100
      %p102 = scmp.ne.s32.totalorder %s94, %s96
      %p103 = scmp.eq.s32.totalorder %s23, 1
      %p104 = por %p102, %p103
      %p105 = scmp.ne.s32.totalorder %s96, %s97
      %p106 = scmp.eq.s32.totalorder %s23, 0
      %p107 = por %p105, %p106
      %p108 = scmp.ne.s32.totalorder %s96, %s97
      %p109 = scmp.eq.s32.totalorder %s24, 1
      %p110 = por %p108, %p109
      %p112 = scmp.ne.s32.totalorder %s97, %s111
      %p113 = scmp.eq.s32.totalorder %s24, 0
      %p114 = por %p112, %p113
      %s116 = sadd.s32 %s115, 1
      %p119 = scmp.eq.s32.totalorder %s18, 1
      %p120 = scmp.ne.s32.totalorder %s115, %s117
      %p121 = scmp.eq.s32.totalorder %s18, 0
      %p122 = por %p120, %p121
      %p123 = scmp.ne.s32.totalorder %s115, %s117
      %p124 = scmp.eq.s32.totalorder %s23, 1
      %p125 = por %p123, %p124
      %p126 = scmp.ne.s32.totalorder %s117, %s118
      %p127 = scmp.eq.s32.totalorder %s23, 0
      %p128 = por %p126, %p127
      %p129 = scmp.ne.s32.totalorder %s117, %s118
      %p130 = scmp.eq.s32.totalorder %s24, 1
      %p131 = por %p129, %p130
      %p133 = scmp.ne.s32.totalorder %s118, %s132
      %p134 = scmp.eq.s32.totalorder %s24, 0
      %p135 = por %p133, %p134
      %s137 = sadd.s32 %s136, 1
      %p140 = scmp.eq.s32.totalorder %s18, 1
      %p141 = scmp.ne.s32.totalorder %s136, %s138
      %p142 = scmp.eq.s32.totalorder %s18, 0
      %p143 = por %p141, %p142
      %p144 = scmp.ne.s32.totalorder %s136, %s138
      %p145 = scmp.eq.s32.totalorder %s23, 1
      %p146 = por %p144, %p145
      %p147 = scmp.ne.s32.totalorder %s138, %s139
      %p148 = scmp.eq.s32.totalorder %s23, 0
      %p149 = por %p147, %p148
      %p150 = scmp.ne.s32.totalorder %s138, %s139
      %p151 = scmp.eq.s32.totalorder %s24, 1
      %p152 = por %p150, %p151
      %p154 = scmp.ne.s32.totalorder %s139, %s153
      %p155 = scmp.eq.s32.totalorder %s24, 0
      %p156 = por %p154, %p155
      %s158 = sadd.s32 %s157, 1
      %p161 = scmp.eq.s32.totalorder %s18, 1
      %p162 = scmp.ne.s32.totalorder %s157, %s159
      %p163 = scmp.eq.s32.totalorder %s18, 0
      %p164 = por %p162, %p163
      %p165 = scmp.ne.s32.totalorder %s157, %s159
      %p166 = scmp.eq.s32.totalorder %s23, 1
      %p167 = por %p165, %p166
      %p168 = scmp.ne.s32.totalorder %s159, %s160
      %p169 = scmp.eq.s32.totalorder %s23, 0
      %p170 = por %p168, %p169
      %p171 = scmp.ne.s32.totalorder %s159, %s160
      %p172 = scmp.eq.s32.totalorder %s24, 1
      %p173 = por %p171, %p172
      %p175 = scmp.ne.s32.totalorder %s160, %s174
      %p176 = scmp.eq.s32.totalorder %s24, 0
      %p177 = por %p175, %p176
      %s179 = sadd.s32 %s178, 1
      %p182 = scmp.eq.s32.totalorder %s18, 1
      %p183 = scmp.ne.s32.totalorder %s178, %s180
      %p184 = scmp.eq.s32.totalorder %s18, 0
      %p185 = por %p183, %p184
      %p186 = scmp.ne.s32.totalorder %s178, %s180
      %p187 = scmp.eq.s32.totalorder %s23, 1
      %p188 = por %p186, %p187
      %p189 = scmp.ne.s32.totalorder %s180, %s181
      %p190 = scmp.eq.s32.totalorder %s23, 0
      %p191 = por %p189, %p190
      %p192 = scmp.ne.s32.totalorder %s180, %s181
      %p193 = scmp.eq.s32.totalorder %s24, 1
      %p194 = por %p192, %p193
      %p196 = scmp.ne.s32.totalorder %s181, %s195
      %p197 = scmp.eq.s32.totalorder %s24, 0
      %p198 = por %p196, %p197
      %s200 = sadd.s32 %s199, 1
      %p203 = scmp.eq.s32.totalorder %s18, 1
      %p204 = scmp.ne.s32.totalorder %s199, %s201
      %p205 = scmp.eq.s32.totalorder %s18, 0
      %p206 = por %p204, %p205
      %p207 = scmp.ne.s32.totalorder %s199, %s201
      %p208 = scmp.eq.s32.totalorder %s23, 1
      %p209 = por %p207, %p208
      %p210 = scmp.ne.s32.totalorder %s201, %s202
      %p211 = scmp.eq.s32.totalorder %s23, 0
      %p212 = por %p210, %p211
      %p213 = scmp.ne.s32.totalorder %s201, %s202
      %p214 = scmp.eq.s32.totalorder %s24, 1
      %p215 = por %p213, %p214
      %p217 = scmp.ne.s32.totalorder %s202, %s216
      %p218 = scmp.eq.s32.totalorder %s24, 0
      %p219 = por %p217, %p218
      %s220 = ssub.s32 %s18, %s25
      %p221 = scmp.eq.s32.totalorder %s220, 0
      %s223 = sadd.s32 %s222, 1
      %s224 = scalar_select %p221, %s222, %s223
      %p227 = pneg %p221
      %p228 = scmp.eq.s32.totalorder %s18, 1
      %p229 = por %p227, %p228
      %p230 = scmp.ne.s32.totalorder %s222, %s225
      %p231 = scmp.eq.s32.totalorder %s18, 0
      %p232 = por %p230, %p231
      %p233 = scmp.ne.s32.totalorder %s222, %s225
      %p234 = scmp.eq.s32.totalorder %s23, 1
      %p235 = por %p233, %p234
      %p236 = scmp.ne.s32.totalorder %s225, %s226
      %p237 = scmp.eq.s32.totalorder %s23, 0
      %p238 = por %p236, %p237
      %p239 = scmp.ne.s32.totalorder %s225, %s226
      %p240 = scmp.eq.s32.totalorder %s24, 1
      %p241 = por %p239, %p240
      %p243 = scmp.ne.s32.totalorder %s226, %s242
      %p244 = scmp.eq.s32.totalorder %s24, 0
      %p245 = por %p243, %p244
      %p246 = scmp.le.s32.totalorder 1, %s18
      %p247 = scmp.lt.s32.totalorder %s18, 3
      %p248 = pnand %p246, %p247
      %p249 = pneg %p248
      // Predicated region
      $region9: #{tpu_custom_call.1} parent=5 // pred_check
        _
      $region10: #{tpu_custom_call.1} parent=5 // pred_check_branch
        %251 = sbr.rel (%p248) target = $region12
      $region11: #{tpu_custom_call.1} parent=5 // pred_region
        %s252 = ssub.s32 %s18, 1
        // Predicated region
        $region13: #{tpu_custom_call.1} parent=11 // pred_check
          %p253 = pneg %p65
        $region14: #{tpu_custom_call.1} parent=11 // pred_check_branch
          %255 = sbr.rel (%p253) target = $region16
        $region15: #{tpu_custom_call.1} parent=11 // pred_region
          _
        $region16: #{tpu_custom_call.1} parent=11 // pred_fallthru
          _
        // Predicated region
        $region17: #{tpu_custom_call.1} parent=11 // pred_check
          %p256 = pneg %p86
        $region18: #{tpu_custom_call.1} parent=11 // pred_check_branch
          %258 = sbr.rel (%p256) target = $region20
        $region19: #{tpu_custom_call.1} parent=11 // pred_region
          _
        $region20: #{tpu_custom_call.1} parent=11 // pred_fallthru
          _
        // Predicated region
        $region21: #{tpu_custom_call.1} parent=11 // pred_check
          %p259 = pneg %p107
        $region22: #{tpu_custom_call.1} parent=11 // pred_check_branch
          %261 = sbr.rel (%p259) target = $region24
        $region23: #{tpu_custom_call.1} parent=11 // pred_region
          _
        $region24: #{tpu_custom_call.1} parent=11 // pred_fallthru
          _
        // Predicated region
        $region25: #{tpu_custom_call.1} parent=11 // pred_check
          %p262 = pneg %p128
        $region26: #{tpu_custom_call.1} parent=11 // pred_check_branch
          %264 = sbr.rel (%p262) target = $region28
        $region27: #{tpu_custom_call.1} parent=11 // pred_region
          _
        $region28: #{tpu_custom_call.1} parent=11 // pred_fallthru
          _
        // Predicated region
        $region29: #{tpu_custom_call.1} parent=11 // pred_check
          %p265 = pneg %p149
        $region30: #{tpu_custom_call.1} parent=11 // pred_check_branch
          %267 = sbr.rel (%p265) target = $region32
        $region31: #{tpu_custom_call.1} parent=11 // pred_region
          _
        $region32: #{tpu_custom_call.1} parent=11 // pred_fallthru
          _
        // Predicated region
        $region33: #{tpu_custom_call.1} parent=11 // pred_check
          %p268 = pneg %p170
        $region34: #{tpu_custom_call.1} parent=11 // pred_check_branch
          %270 = sbr.rel (%p268) target = $region36
        $region35: #{tpu_custom_call.1} parent=11 // pred_region
          _
        $region36: #{tpu_custom_call.1} parent=11 // pred_fallthru
          _
        // Predicated region
        $region37: #{tpu_custom_call.1} parent=11 // pred_check
          %p271 = pneg %p191
        $region38: #{tpu_custom_call.1} parent=11 // pred_check_branch
          %273 = sbr.rel (%p271) target = $region40
        $region39: #{tpu_custom_call.1} parent=11 // pred_region
          _
        $region40: #{tpu_custom_call.1} parent=11 // pred_fallthru
          _
        // Predicated region
        $region41: #{tpu_custom_call.1} parent=11 // pred_check
          %p274 = pneg %p212
        $region42: #{tpu_custom_call.1} parent=11 // pred_check_branch
          %276 = sbr.rel (%p274) target = $region44
        $region43: #{tpu_custom_call.1} parent=11 // pred_region
          _
        $region44: #{tpu_custom_call.1} parent=11 // pred_fallthru
          _
      $region12: #{tpu_custom_call.1} parent=5 // pred_fallthru
        _
      %p277 = scmp.lt.s32.totalorder %s18, 2
      // Predicated region
      $region45: #{tpu_custom_call.1} parent=5 // pred_check
        %p278 = pneg %p277
      $region46: #{tpu_custom_call.1} parent=5 // pred_check_branch
        %280 = sbr.rel (%p278) target = $region48
      $region47: #{tpu_custom_call.1} parent=5 // pred_region
        // Predicated region
        $region49: #{tpu_custom_call.1} parent=47 // pred_check
          %p281 = pneg %p38
        $region50: #{tpu_custom_call.1} parent=47 // pred_check_branch
          %283 = sbr.rel (%p281) target = $region52
        $region51: #{tpu_custom_call.1} parent=47 // pred_region
          %s284 = sand.u32 %s28, 1
          %s285 = sand.u32 %s28, 1
          %s286 = smul.addr %s285, 64
          %s287 = scalar_lea.vmem [#allocation3], %s286
          %s288 = smul.addr %s18, 2
          %s289 = smul.addr %s288, 8
          %s290 = scalar_lea.vmem %s0, %s289
          // Predicated region
          $region53: #{tpu_custom_call.1} parent=51 // pred_check
            _
          $region54: #{tpu_custom_call.1} parent=51 // pred_check_branch
            %292 = sbr.rel (0) target = $region56
          $region55: #{tpu_custom_call.1} parent=51 // pred_region
            // Predicated region
            $region57: #{tpu_custom_call.1} parent=55 // pred_check
              _
            $region58: #{tpu_custom_call.1} parent=55 // pred_check_branch
              %294 = sbr.rel (0) target = $region60
            $region59: #{tpu_custom_call.1} parent=55 // pred_region
              loop: start=0, step=1, limit=1
              $region61: #{tpu_custom_call.1} parent=59 // loop_pre_header
                _
              $region62: #{tpu_custom_call.1} parent=59 // loop_header
                %s296 = sphi 0, %s300
                %p297 = scmp.ge.s32.totalorder %s296, 1
                %s301 = sphi %s290, %s290
                %s302 = sphi %s287, %s287
              $region63: #{tpu_custom_call.1} parent=59 // loop_header_branch
                %299 = sbr.rel (%p297) target = $region67
              $region64: #{tpu_custom_call.1} parent=59 // loop_body
                %v303 = vld [vmem:[%s301] sm:$0xff]
                %304 = vst [vmem:[%s302] sm:$0xff] %v303
                %v305 = vld [vmem:[%s301 + $0x8] sm:$0xff]
                %306 = vst [vmem:[%s302 + $0x8] sm:$0xff] %v305
                %v307 = vld [vmem:[%s301 + $0x20] sm:$0xff]
                %308 = vst [vmem:[%s302 + $0x10] sm:$0xff] %v307
                %v309 = vld [vmem:[%s301 + $0x28] sm:$0xff]
                %310 = vst [vmem:[%s302 + $0x18] sm:$0xff] %v309
                %v311 = vld [vmem:[%s301 + $0x40] sm:$0xff]
                %312 = vst [vmem:[%s302 + $0x20] sm:$0xff] %v311
                %v313 = vld [vmem:[%s301 + $0x48] sm:$0xff]
                %314 = vst [vmem:[%s302 + $0x28] sm:$0xff] %v313
                %v315 = vld [vmem:[%s301 + $0x60] sm:$0xff]
                %316 = vst [vmem:[%s302 + $0x30] sm:$0xff] %v315
                %v317 = vld [vmem:[%s301 + $0x68] sm:$0xff]
                %318 = vst [vmem:[%s302 + $0x38] sm:$0xff] %v317
              $region65: #{tpu_custom_call.1} parent=59 // loop_footer
                %s300 = sadd.s32 1, %s296
              $region66: #{tpu_custom_call.1} parent=59 // loop_footer_branch
                %295 = sbr.rel target = $region62
              $region67: #{tpu_custom_call.1} parent=59 // loop_exit
                _
            $region60: #{tpu_custom_call.1} parent=55 // pred_fallthru
              _
            // Predicated region
            $region68: #{tpu_custom_call.1} parent=55 // pred_check
              _
            $region69: #{tpu_custom_call.1} parent=55 // pred_check_branch
              %320 = sbr.rel target = $region71
            $region70: #{tpu_custom_call.1} parent=55 // pred_region
              _
            $region71: #{tpu_custom_call.1} parent=55 // pred_fallthru
              _
          $region56: #{tpu_custom_call.1} parent=51 // pred_fallthru
            _
          %321 = vnop
        $region52: #{tpu_custom_call.1} parent=47 // pred_fallthru
          _
      $region48: #{tpu_custom_call.1} parent=5 // pred_fallthru
        _
      %p322 = scmp.le.s32.totalorder 1, %s18
      %p323 = scmp.lt.s32.totalorder %s18, 3
      %p324 = pnand %p322, %p323
      %p325 = pneg %p324
      // Predicated region
      $region72: #{tpu_custom_call.1} parent=5 // pred_check
        _
      $region73: #{tpu_custom_call.1} parent=5 // pred_check_branch
        %327 = sbr.rel (%p324) target = $region75
      $region74: #{tpu_custom_call.1} parent=5 // pred_region
        %s328 = ssub.s32 %s18, 1
        %s329 = sand.u32 %s31, 1
        %s330 = sand.u32 %s31, 1
        %s331 = smul.addr %s330, 64
        %s332 = scalar_lea.vmem [#allocation3], %s331
        // Predicated region
        $region76: #{tpu_custom_call.1} parent=74 // pred_check
          %p333 = pneg %p44
        $region77: #{tpu_custom_call.1} parent=74 // pred_check_branch
          %335 = sbr.rel (%p333) target = $region79
        $region78: #{tpu_custom_call.1} parent=74 // pred_region
          _
        $region79: #{tpu_custom_call.1} parent=74 // pred_fallthru
          _
        %s336 = sand.u32 %s31, 1
        %s337 = sand.u32 %s31, 1
        %s338 = smul.addr %s337, 64
        %s339 = scalar_lea.vmem [#allocation3], %s338
        %p340 = pneg %p44
        %p341 = pneg %p41
        %p342 = pneg %p65
        %p343 = pneg %p62
        %p344 = pneg %p86
        %p345 = pneg %p83
        %p346 = pneg %p107
        %p347 = pneg %p104
        %p348 = pneg %p128
        %p349 = pneg %p125
        %p350 = pneg %p149
        %p351 = pneg %p146
        %p352 = pneg %p170
        %p353 = pneg %p167
        %p354 = pneg %p191
        %p355 = pneg %p188
        %p356 = pneg %p212
        %p357 = pneg %p209
        %p358 = pneg %p238
        %p359 = pneg %p235
        %s360 = sand.u32 %s225, 1
        %s361 = scalar_lea.sflag [#allocation5], %s360
        %s362 = sand.u32 %s225, 1
        %s363 = smul.addr %s362, 64
        %s364 = scalar_lea.vmem [#allocation4], %s363
        %v365 = vld [vmem:[%s332] sm:$0xff]
        %v366 = vld [vmem:[%s332 + $0x8] sm:$0xff]
        %v367 = vld [vmem:[%s332 + $0x10] sm:$0xff]
        %v368 = vld [vmem:[%s332 + $0x18] sm:$0xff]
        %v369 = vld [vmem:[%s332 + $0x20] sm:$0xff]
        %v370 = vld [vmem:[%s332 + $0x28] sm:$0xff]
        %v371 = vld [vmem:[%s332 + $0x30] sm:$0xff]
        %v372 = vld [vmem:[%s332 + $0x38] sm:$0xff]
        %v373 = vld [vmem:[%s1] sm:$0xff]
        %v374 = vld [vmem:[%s1 + $0x8] sm:$0xff]
        %v375 = vld [vmem:[%s1 + $0x10] sm:$0xff]
        %v376 = vld [vmem:[%s1 + $0x18] sm:$0xff]
        %v377 = vld [vmem:[%s2] sm:$0xff]
        %v378 = vld [vmem:[%s2 + $0x8] sm:$0xff]
        %v379 = vld [vmem:[%s2 + $0x10] sm:$0xff]
        %v380 = vld [vmem:[%s2 + $0x18] sm:$0xff]
        %382 = vset.pattern.permute.xlu0 0
        %383 = vperm.xlu0 %382, %v377
        %v384 = vpop.permute.xlu0 %383
        %387 = vset.pattern.permute.xlu0 0
        %388 = vperm.xlu0 %387, %v378
        %v389 = vpop.permute.xlu0 %388
        %392 = vset.pattern.permute.xlu0 0
        %393 = vperm.xlu0 %392, %v379
        %v394 = vpop.permute.xlu0 %393
        %397 = vset.pattern.permute.xlu0 0
        %398 = vperm.xlu0 %397, %v380
        %v399 = vpop.permute.xlu0 %398
        %vm401 = vcmask 261120
        %v403 = vsel %vm401, %v373, 0
        %v406 = vsel %vm401, %v374, 0
        %v409 = vsel %vm401, %v375, 0
        %v412 = vsel %vm401, %v376, 0
        %414 = vmatpush.msra.mxu0 0.0
        %415 = vmatpush.msra.mxu0 0.0
        %416 = vmatpush.msra.mxu0 0.0
        %417 = vmatpush.msra.mxu0 0.0
        %418 = vmatpush.msra.mxu0 0.0
        %419 = vmatpush.msra.mxu0 0.0
        %420 = vmatpush.msra.mxu0 0.0
        %421 = vmatpush.msra.mxu0 0.0
        %422 = vmatpush.msra.mxu0 0.0
        %423 = vmatpush.msra.mxu0 0.0
        %424 = vmatpush.msra.mxu0 0.0
        %425 = vmatpush.msra.mxu0 0.0
        %426 = vmatpush.msra.mxu0 %v371
        %427 = vmatpush.msra.mxu0 %v369
        %428 = vmatpush.msra.mxu0 %v367
        %429 = vmatpush.msra.mxu0 %v365
        %430 = vmatmul.f32.gmra.mxu0 %v403
        %v431 = vpop.f32.mrf.mxu0
        %v432 = vadd.f32 %v384, %v431
        %433 = vmatmul.f32.gmra.mxu0 %v406
        %v434 = vpop.f32.mrf.mxu0
        %v435 = vadd.f32 %v389, %v434
        %436 = vmatmul.f32.gmra.mxu0 %v409
        %v437 = vpop.f32.mrf.mxu0
        %v438 = vadd.f32 %v394, %v437
        %439 = vmatmul.f32.gmra.mxu0 %v412
        %v440 = vpop.f32.mrf.mxu0
        %v441 = vadd.f32 %v399, %v440
        %442 = vdwg.mxu0
        %443 = vmatpush.msra.mxu0 0.0
        %444 = vmatpush.msra.mxu0 0.0
        %445 = vmatpush.msra.mxu0 0.0
        %446 = vmatpush.msra.mxu0 0.0
        %447 = vmatpush.msra.mxu0 0.0
        %448 = vmatpush.msra.mxu0 0.0
        %449 = vmatpush.msra.mxu0 0.0
        %450 = vmatpush.msra.mxu0 0.0
        %451 = vmatpush.msra.mxu0 0.0
        %452 = vmatpush.msra.mxu0 0.0
        %453 = vmatpush.msra.mxu0 0.0
        %454 = vmatpush.msra.mxu0 0.0
        %455 = vmatpush.msra.mxu0 %v372
        %456 = vmatpush.msra.mxu0 %v370
        %457 = vmatpush.msra.mxu0 %v368
        %458 = vmatpush.msra.mxu0 %v366
        %459 = vmatmul.f32.gmra.mxu0 %v403
        %v460 = vpop.f32.mrf.mxu0
        %v461 = vadd.f32 %v384, %v460
        %462 = vmatmul.f32.gmra.mxu0 %v406
        %v463 = vpop.f32.mrf.mxu0
        %v464 = vadd.f32 %v389, %v463
        %465 = vmatmul.f32.gmra.mxu0 %v409
        %v466 = vpop.f32.mrf.mxu0
        %v467 = vadd.f32 %v394, %v466
        %468 = vmatmul.f32.gmra.mxu0 %v412
        %v469 = vpop.f32.mrf.mxu0
        %v470 = vadd.f32 %v399, %v469
        %471 = vdwg.mxu0
        %v472 = vmax.f32 %v432, 0.0
        %v473 = vmax.f32 %v461, 0.0
        %v474 = vld [vmem:[%s3] sm:$0xff]
        %v475 = vld [vmem:[%s3 + $0x8] sm:$0xff]
        %v476 = vld [vmem:[%s3 + $0x10] sm:$0xff]
        %v477 = vld [vmem:[%s3 + $0x18] sm:$0xff]
        %v478 = vld [vmem:[%s3 + $0x20] sm:$0xff]
        %v479 = vld [vmem:[%s3 + $0x28] sm:$0xff]
        %v480 = vld [vmem:[%s3 + $0x30] sm:$0xff]
        %v481 = vld [vmem:[%s3 + $0x38] sm:$0xff]
        %v482 = vld [vmem:[%s3 + $0x40] sm:$0xff]
        %v483 = vld [vmem:[%s3 + $0x48] sm:$0xff]
        %v484 = vld [vmem:[%s3 + $0x50] sm:$0xff]
        %v485 = vld [vmem:[%s3 + $0x58] sm:$0xff]
        %v486 = vld [vmem:[%s3 + $0x60] sm:$0xff]
        %v487 = vld [vmem:[%s3 + $0x68] sm:$0xff]
        %v488 = vld [vmem:[%s3 + $0x70] sm:$0xff]
        %v489 = vld [vmem:[%s3 + $0x78] sm:$0xff]
        %v490 = vld [vmem:[%s3 + $0x80] sm:$0xff]
        %v491 = vld [vmem:[%s3 + $0x88] sm:$0xff]
        %v492 = vld [vmem:[%s3 + $0x90] sm:$0xff]
        %v493 = vld [vmem:[%s3 + $0x98] sm:$0xff]
        %v494 = vld [vmem:[%s3 + $0xa0] sm:$0xff]
        %v495 = vld [vmem:[%s3 + $0xa8] sm:$0xff]
        %v496 = vld [vmem:[%s3 + $0xb0] sm:$0xff]
        %v497 = vld [vmem:[%s3 + $0xb8] sm:$0xff]
        %v498 = vld [vmem:[%s3 + $0xc0] sm:$0xff]
        %v499 = vld [vmem:[%s3 + $0xc8] sm:$0xff]
        %v500 = vld [vmem:[%s3 + $0xd0] sm:$0xff]
        %v501 = vld [vmem:[%s3 + $0xd8] sm:$0xff]
        %v502 = vld [vmem:[%s3 + $0xe0] sm:$0xff]
        %v503 = vld [vmem:[%s3 + $0xe8] sm:$0xff]
        %v504 = vld [vmem:[%s3 + $0xf0] sm:$0xff]
        %v505 = vld [vmem:[%s3 + $0xf8] sm:$0xff]
        %506 = vmatpush.msra.mxu0 %v489
        %507 = vmatpush.msra.mxu0 %v488
        %508 = vmatpush.msra.mxu0 %v487
        %509 = vmatpush.msra.mxu0 %v486
        %510 = vmatpush.msra.mxu0 %v485
        %511 = vmatpush.msra.mxu0 %v484
        %512 = vmatpush.msra.mxu0 %v483
        %513 = vmatpush.msra.mxu0 %v482
        %514 = vmatpush.msra.mxu0 %v481
        %515 = vmatpush.msra.mxu0 %v480
        %516 = vmatpush.msra.mxu0 %v479
        %517 = vmatpush.msra.mxu0 %v478
        %518 = vmatpush.msra.mxu0 %v477
        %519 = vmatpush.msra.mxu0 %v476
        %520 = vmatpush.msra.mxu0 %v475
        %521 = vmatpush.msra.mxu0 %v474
        %522 = vmatmul.f32.gmra.mxu0 %v435
        %v523 = vpop.f32.mrf.mxu0
        %v524 = vadd.f32 0.0, %v523
        %525 = vmatmul.f32.gmra.mxu0 %v438
        %v526 = vpop.f32.mrf.mxu0
        %v527 = vadd.f32 0.0, %v526
        %528 = vmatmul.f32.gmra.mxu0 %v441
        %v529 = vpop.f32.mrf.mxu0
        %v530 = vadd.f32 0.0, %v529
        %531 = vdwg.mxu0
        %532 = vmatpush.msra.mxu0 %v505
        %533 = vmatpush.msra.mxu0 %v504
        %534 = vmatpush.msra.mxu0 %v503
        %535 = vmatpush.msra.mxu0 %v502
        %536 = vmatpush.msra.mxu0 %v501
        %537 = vmatpush.msra.mxu0 %v500
        %538 = vmatpush.msra.mxu0 %v499
        %539 = vmatpush.msra.mxu0 %v498
        %540 = vmatpush.msra.mxu0 %v497
        %541 = vmatpush.msra.mxu0 %v496
        %542 = vmatpush.msra.mxu0 %v495
        %543 = vmatpush.msra.mxu0 %v494
        %544 = vmatpush.msra.mxu0 %v493
        %545 = vmatpush.msra.mxu0 %v492
        %546 = vmatpush.msra.mxu0 %v491
        %547 = vmatpush.msra.mxu0 %v490
        %548 = vmatmul.f32.gmra.mxu0 %v464
        %v549 = vpop.f32.mrf.mxu0
        %v550 = vadd.f32 %v524, %v549
        %551 = vmatmul.f32.gmra.mxu0 %v467
        %v552 = vpop.f32.mrf.mxu0
        %v553 = vadd.f32 %v527, %v552
        %554 = vmatmul.f32.gmra.mxu0 %v470
        %v555 = vpop.f32.mrf.mxu0
        %v556 = vadd.f32 %v530, %v555
        %557 = vdwg.mxu0
        %v558 = vld [vmem:[%s4] sm:$0x1]
        %v559 = vperm.slane %v558, 0
        %v560 = vmul.f32 %v550, %v559
        %v561 = vld [vmem:[%s4 + $0x1] sm:$0x1]
        %v562 = vperm.slane %v561, 0
        %v563 = vmul.f32 %v553, %v562
        %v564 = vadd.f32 %v560, %v563
        %v565 = vld [vmem:[%s4 + $0x2] sm:$0x1]
        %v566 = vperm.slane %v565, 0
        %v567 = vmul.f32 %v556, %v566
        %v568 = vadd.f32 %v564, %v567
        %v569 = vmax.f32 %v568, 0.0
        %v570 = vld [vmem:[%s5] sm:$0xff]
        %v571 = vld [vmem:[%s5 + $0x8] sm:$0xff]
        %v572 = vld [vmem:[%s5 + $0x10] sm:$0xff]
        %v573 = vld [vmem:[%s5 + $0x18] sm:$0xff]
        %v574 = vld [vmem:[%s5 + $0x20] sm:$0xff]
        %v575 = vld [vmem:[%s5 + $0x28] sm:$0xff]
        %v576 = vld [vmem:[%s5 + $0x30] sm:$0xff]
        %v577 = vld [vmem:[%s5 + $0x38] sm:$0xff]
        %v578 = vld [vmem:[%s5 + $0x40] sm:$0xff]
        %v579 = vld [vmem:[%s5 + $0x48] sm:$0xff]
        %v580 = vld [vmem:[%s5 + $0x50] sm:$0xff]
        %v581 = vld [vmem:[%s5 + $0x58] sm:$0xff]
        %v582 = vld [vmem:[%s5 + $0x60] sm:$0xff]
        %v583 = vld [vmem:[%s5 + $0x68] sm:$0xff]
        %v584 = vld [vmem:[%s5 + $0x70] sm:$0xff]
        %v585 = vld [vmem:[%s5 + $0x78] sm:$0xff]
        %v586 = vld [vmem:[%s5 + $0x80] sm:$0xff]
        %v587 = vld [vmem:[%s5 + $0x88] sm:$0xff]
        %v588 = vld [vmem:[%s5 + $0x90] sm:$0xff]
        %v589 = vld [vmem:[%s5 + $0x98] sm:$0xff]
        %v590 = vld [vmem:[%s5 + $0xa0] sm:$0xf]
        %v591 = vld [vmem:[%s5 + $0xa8] sm:$0xf]
        %vm592 = vcmask 687104
        %v594 = vsel %vm592, %v569, 0
        %vm596 = vcmask 1043456
        %v598 = vsel %vm596, %v590, 0
        %v601 = vsel %vm596, %v591, 0
        %603 = vmatpush.msra.mxu0 0.0
        %604 = vmatpush.msra.mxu0 0.0
        %605 = vmatpush.msra.mxu0 0.0
        %606 = vmatpush.msra.mxu0 0.0
        %607 = vmatpush.msra.mxu0 0.0
        %608 = vmatpush.msra.mxu0 %v598
        %609 = vmatpush.msra.mxu0 %v588
        %610 = vmatpush.msra.mxu0 %v586
        %611 = vmatpush.msra.mxu0 %v584
        %612 = vmatpush.msra.mxu0 %v582
        %613 = vmatpush.msra.mxu0 %v580
        %614 = vmatpush.msra.mxu0 %v578
        %615 = vmatpush.msra.mxu0 %v576
        %616 = vmatpush.msra.mxu0 %v574
        %617 = vmatpush.msra.mxu0 %v572
        %618 = vmatpush.msra.mxu0 %v570
        %619 = vmatmul.f32.gmra.mxu0 %v594
        %v620 = vpop.f32.mrf.mxu0
        %v621 = vadd.f32 0.0, %v620
        %622 = vdwg.mxu0
        %623 = vmatpush.msra.mxu0 0.0
        %624 = vmatpush.msra.mxu0 0.0
        %625 = vmatpush.msra.mxu0 0.0
        %626 = vmatpush.msra.mxu0 0.0
        %627 = vmatpush.msra.mxu0 0.0
        %628 = vmatpush.msra.mxu0 %v601
        %629 = vmatpush.msra.mxu0 %v589
        %630 = vmatpush.msra.mxu0 %v587
        %631 = vmatpush.msra.mxu0 %v585
        %632 = vmatpush.msra.mxu0 %v583
        %633 = vmatpush.msra.mxu0 %v581
        %634 = vmatpush.msra.mxu0 %v579
        %635 = vmatpush.msra.mxu0 %v577
        %636 = vmatpush.msra.mxu0 %v575
        %637 = vmatpush.msra.mxu0 %v573
        %638 = vmatpush.msra.mxu0 %v571
        %639 = vmatmul.f32.gmra.mxu0 %v594
        %v640 = vpop.f32.mrf.mxu0
        %v641 = vadd.f32 0.0, %v640
        %642 = vdwg.mxu0
        %v643 = vadd.f32 %v472, %v621
        %v644 = vadd.f32 %v473, %v641
        %645 = vrot.lane.b32.xlu0 %v643, 17
        %v646 = vpop.permute.xlu0 %645
        %647 = vrot.lane.b32.xlu0 %v644, 17
        %v648 = vpop.permute.xlu0 %647
        %v649 = vlaneseq
        %v650 = vand.u32 %v649, 127
        %vm651 = vcmp.lt.s32.totalorder %v650, 17
        %v652 = vsel %vm651, %v646, %v648
        %v653 = vsel %vm651, %v648, %v646
        %v654 = vld [vmem:[%s6] ss:$8 sm:$0x3]
        %v656 = vperm.slane %v654, 0
        %v657 = vperm.slane %v654, 1
        %v660 = vmul.f32 %v653, %v656
        %v661 = vmul.f32 %v652, %v657
        %662 = vst [vmem:[#allocation2] sm:$0xff] %v660
        %663 = vst [vmem:[#allocation2 + $0x8] sm:$0xff] %v661
        %664 = vrot.lane.b32.xlu0 %v643, 16
        %v665 = vpop.permute.xlu0 %664
        %666 = vrot.lane.b32.xlu0 %v644, 16
        %v667 = vpop.permute.xlu0 %666
        %vm668 = vcmp.lt.s32.totalorder %v650, 16
        %v669 = vsel %vm668, %v665, %v667
        %v670 = vsel %vm668, %v667, %v665
        %s671 = scalar_lea.vmem %s6, 1
        %v672 = vld [vmem:[%s671] ss:$8 sm:$0x3]
        %v674 = vperm.slane %v672, 0
        %v675 = vperm.slane %v672, 1
        %v678 = vmul.f32 %v670, %v674
        %v679 = vmul.f32 %v669, %v675
        %680 = vst [vmem:[#allocation2 + $0x10] sm:$0xff] %v678
        %681 = vst [vmem:[#allocation2 + $0x18] sm:$0xff] %v679
        %682 = vrot.lane.b32.xlu0 %v643, 15
        %v683 = vpop.permute.xlu0 %682
        %684 = vrot.lane.b32.xlu0 %v644, 15
        %v685 = vpop.permute.xlu0 %684
        %vm686 = vcmp.lt.s32.totalorder %v650, 15
        %v687 = vsel %vm686, %v683, %v685
        %v688 = vsel %vm686, %v685, %v683
        %s689 = scalar_lea.vmem %s6, 2
        %v690 = vld [vmem:[%s689] ss:$8 sm:$0x3]
        %v692 = vperm.slane %v690, 0
        %v693 = vperm.slane %v690, 1
        %v696 = vmul.f32 %v688, %v692
        %v697 = vmul.f32 %v687, %v693
        %698 = vst [vmem:[#allocation2 + $0x20] sm:$0xff] %v696
        %699 = vst [vmem:[#allocation2 + $0x28] sm:$0xff] %v697
        %700 = vrot.lane.b32.xlu0 %v643, 1
        %v701 = vpop.permute.xlu0 %700
        %702 = vrot.lane.b32.xlu0 %v644, 1
        %v703 = vpop.permute.xlu0 %702
        %vm704 = vcmp.lt.s32.totalorder %v650, 1
        %v705 = vsel %vm704, %v701, %v703
        %v706 = vsel %vm704, %v703, %v701
        %s707 = scalar_lea.vmem %s6, 3
        %v708 = vld [vmem:[%s707] ss:$8 sm:$0x3]
        %v710 = vperm.slane %v708, 0
        %v711 = vperm.slane %v708, 1
        %v714 = vmul.f32 %v706, %v710
        %v715 = vmul.f32 %v705, %v711
        %716 = vst [vmem:[#allocation2 + $0x30] sm:$0xff] %v714
        %717 = vst [vmem:[#allocation2 + $0x38] sm:$0xff] %v715
        %718 = vst [vmem:[#allocation2 + $0x40] sm:$0xff] %v643
        %719 = vst [vmem:[#allocation2 + $0x48] sm:$0xff] %v644
        %720 = vrot.lane.b32.xlu0 %v643, 127
        %v721 = vpop.permute.xlu0 %720
        %722 = vrot.lane.b32.xlu0 %v644, 127
        %v723 = vpop.permute.xlu0 %722
        %vm724 = vcmp.lt.s32.totalorder %v650, 127
        %v725 = vsel %vm724, %v721, %v723
        %v726 = vsel %vm724, %v723, %v721
        %s727 = scalar_lea.vmem %s6, 5
        %v728 = vld [vmem:[%s727] ss:$8 sm:$0x3]
        %v730 = vperm.slane %v728, 0
        %v731 = vperm.slane %v728, 1
        %v734 = vmul.f32 %v725, %v730
        %v735 = vmul.f32 %v726, %v731
        %736 = vst [vmem:[#allocation2 + $0x50] sm:$0xff] %v734
        %737 = vst [vmem:[#allocation2 + $0x58] sm:$0xff] %v735
        %738 = vrot.lane.b32.xlu0 %v643, 113
        %v739 = vpop.permute.xlu0 %738
        %740 = vrot.lane.b32.xlu0 %v644, 113
        %v741 = vpop.permute.xlu0 %740
        %vm742 = vcmp.lt.s32.totalorder %v650, 113
        %v743 = vsel %vm742, %v739, %v741
        %v744 = vsel %vm742, %v741, %v739
        %s745 = scalar_lea.vmem %s6, 6
        %v746 = vld [vmem:[%s745] ss:$8 sm:$0x3]
        %v748 = vperm.slane %v746, 0
        %v749 = vperm.slane %v746, 1
        %v752 = vmul.f32 %v743, %v748
        %v753 = vmul.f32 %v744, %v749
        %754 = vst [vmem:[#allocation2 + $0x60] sm:$0xff] %v752
        %755 = vst [vmem:[#allocation2 + $0x68] sm:$0xff] %v753
        %756 = vrot.lane.b32.xlu0 %v643, 112
        %v757 = vpop.permute.xlu0 %756
        %758 = vrot.lane.b32.xlu0 %v644, 112
        %v759 = vpop.permute.xlu0 %758
        %vm760 = vcmp.lt.s32.totalorder %v650, 112
        %v761 = vsel %vm760, %v757, %v759
        %v762 = vsel %vm760, %v759, %v757
        %s763 = scalar_lea.vmem %s6, 7
        %v764 = vld [vmem:[%s763] ss:$8 sm:$0x3]
        %v766 = vperm.slane %v764, 0
        %v767 = vperm.slane %v764, 1
        %v770 = vmul.f32 %v761, %v766
        %v771 = vmul.f32 %v762, %v767
        %772 = vst [vmem:[#allocation2 + $0x70] sm:$0xff] %v770
        %773 = vst [vmem:[#allocation2 + $0x78] sm:$0xff] %v771
        %774 = vrot.lane.b32.xlu0 %v643, 111
        %v775 = vpop.permute.xlu0 %774
        %776 = vrot.lane.b32.xlu0 %v644, 111
        %v777 = vpop.permute.xlu0 %776
        %vm778 = vcmp.lt.s32.totalorder %v650, 111
        %v779 = vsel %vm778, %v775, %v777
        %v780 = vsel %vm778, %v777, %v775
        %s781 = scalar_lea.vmem %s6, 16
        %v782 = vld [vmem:[%s781] ss:$8 sm:$0x3]
        %v784 = vperm.slane %v782, 0
        %v785 = vperm.slane %v782, 1
        %v788 = vmul.f32 %v779, %v784
        %v789 = vmul.f32 %v780, %v785
        %790 = vst [vmem:[#allocation2 + $0x80] sm:$0xff] %v788
        %791 = vst [vmem:[#allocation2 + $0x88] sm:$0xff] %v789
        %v792 = vld [vmem:[%s7] sm:$0xff]
        %v793 = vld [vmem:[%s7 + $0x8] sm:$0xff]
        %v794 = vld [vmem:[%s7 + $0x10] sm:$0xff]
        %v795 = vld [vmem:[%s7 + $0x18] sm:$0xff]
        %v796 = vld [vmem:[#allocation2] sm:$0xff]
        %v797 = vld [vmem:[#allocation2 + $0x8] sm:$0xff]
        %v798 = vld [vmem:[#allocation2 + $0x10] sm:$0xff]
        %v799 = vld [vmem:[#allocation2 + $0x18] sm:$0xff]
        %v800 = vld [vmem:[#allocation2 + $0x20] sm:$0xff]
        %v801 = vld [vmem:[#allocation2 + $0x28] sm:$0xff]
        %v802 = vld [vmem:[#allocation2 + $0x30] sm:$0xff]
        %v803 = vld [vmem:[#allocation2 + $0x38] sm:$0xff]
        %v804 = vld [vmem:[#allocation2 + $0x40] sm:$0xff]
        %v805 = vld [vmem:[#allocation2 + $0x48] sm:$0xff]
        %v806 = vld [vmem:[#allocation2 + $0x50] sm:$0xff]
        %v807 = vld [vmem:[#allocation2 + $0x58] sm:$0xff]
        %v808 = vld [vmem:[#allocation2 + $0x60] sm:$0xff]
        %v809 = vld [vmem:[#allocation2 + $0x68] sm:$0xff]
        %v810 = vld [vmem:[#allocation2 + $0x70] sm:$0xff]
        %v811 = vld [vmem:[#allocation2 + $0x78] sm:$0xff]
        %v812 = vld [vmem:[#allocation2 + $0x80] sm:$0xff]
        %v813 = vld [vmem:[#allocation2 + $0x88] sm:$0xff]
        %v814 = vld [vmem:[%s8] sm:$0xff]
        %v815 = vld [vmem:[%s8 + $0x8] sm:$0xff]
        %v816 = vld [vmem:[%s8 + $0x10] sm:$0xff]
        %v817 = vld [vmem:[%s8 + $0x18] sm:$0xff]
        %819 = vset.pattern.permute.xlu0 0
        %820 = vperm.xlu0 %819, %v814
        %v821 = vpop.permute.xlu0 %820
        %824 = vset.pattern.permute.xlu0 0
        %825 = vperm.xlu0 %824, %v815
        %v826 = vpop.permute.xlu0 %825
        %829 = vset.pattern.permute.xlu0 0
        %830 = vperm.xlu0 %829, %v816
        %v831 = vpop.permute.xlu0 %830
        %834 = vset.pattern.permute.xlu0 0
        %835 = vperm.xlu0 %834, %v817
        %v836 = vpop.permute.xlu0 %835
        %vm838 = vcmask 588800
        %v840 = vsel %vm838, %v792, 0
        %v843 = vsel %vm838, %v793, 0
        %v846 = vsel %vm838, %v794, 0
        %v849 = vsel %vm838, %v795, 0
        %851 = vmatpush.msra.mxu0 0.0
        %852 = vmatpush.msra.mxu0 0.0
        %853 = vmatpush.msra.mxu0 0.0
        %854 = vmatpush.msra.mxu0 0.0
        %855 = vmatpush.msra.mxu0 0.0
        %856 = vmatpush.msra.mxu0 0.0
        %857 = vmatpush.msra.mxu0 0.0
        %858 = vmatpush.msra.mxu0 %v812
        %859 = vmatpush.msra.mxu0 %v810
        %860 = vmatpush.msra.mxu0 %v808
        %861 = vmatpush.msra.mxu0 %v806
        %862 = vmatpush.msra.mxu0 %v804
        %863 = vmatpush.msra.mxu0 %v802
        %864 = vmatpush.msra.mxu0 %v800
        %865 = vmatpush.msra.mxu0 %v798
        %866 = vmatpush.msra.mxu0 %v796
        %867 = vmatmul.f32.gmra.mxu0 %v840
        %v868 = vpop.f32.mrf.mxu0
        %v869 = vadd.f32 %v821, %v868
        %870 = vmatmul.f32.gmra.mxu0 %v843
        %v871 = vpop.f32.mrf.mxu0
        %v872 = vadd.f32 %v826, %v871
        %873 = vmatmul.f32.gmra.mxu0 %v846
        %v874 = vpop.f32.mrf.mxu0
        %v875 = vadd.f32 %v831, %v874
        %876 = vmatmul.f32.gmra.mxu0 %v849
        %v877 = vpop.f32.mrf.mxu0
        %v878 = vadd.f32 %v836, %v877
        %879 = vdwg.mxu0
        %880 = vmatpush.msra.mxu0 0.0
        %881 = vmatpush.msra.mxu0 0.0
        %882 = vmatpush.msra.mxu0 0.0
        %883 = vmatpush.msra.mxu0 0.0
        %884 = vmatpush.msra.mxu0 0.0
        %885 = vmatpush.msra.mxu0 0.0
        %886 = vmatpush.msra.mxu0 0.0
        %887 = vmatpush.msra.mxu0 %v813
        %888 = vmatpush.msra.mxu0 %v811
        %889 = vmatpush.msra.mxu0 %v809
        %890 = vmatpush.msra.mxu0 %v807
        %891 = vmatpush.msra.mxu0 %v805
        %892 = vmatpush.msra.mxu0 %v803
        %893 = vmatpush.msra.mxu0 %v801
        %894 = vmatpush.msra.mxu0 %v799
        %895 = vmatpush.msra.mxu0 %v797
        %896 = vmatmul.f32.gmra.mxu0 %v840
        %v897 = vpop.f32.mrf.mxu0
        %v898 = vadd.f32 %v821, %v897
        %899 = vmatmul.f32.gmra.mxu0 %v843
        %v900 = vpop.f32.mrf.mxu0
        %v901 = vadd.f32 %v826, %v900
        %902 = vmatmul.f32.gmra.mxu0 %v846
        %v903 = vpop.f32.mrf.mxu0
        %v904 = vadd.f32 %v831, %v903
        %905 = vmatmul.f32.gmra.mxu0 %v849
        %v906 = vpop.f32.mrf.mxu0
        %v907 = vadd.f32 %v836, %v906
        %908 = vdwg.mxu0
        %v909 = vmax.f32 %v869, 0.0
        %v910 = vmax.f32 %v898, 0.0
        %v911 = vmax.f32 %v872, 0.0
        %v912 = vmax.f32 %v901, 0.0
        %v913 = vmax.f32 %v875, 0.0
        %v914 = vmax.f32 %v904, 0.0
        %v915 = vmax.f32 %v878, 0.0
        %v916 = vmax.f32 %v907, 0.0
        %917 = vst [vmem:[%s364] sm:$0xff] %v909
        %918 = vst [vmem:[%s364 + $0x8] sm:$0xff] %v910
        %919 = vst [vmem:[%s364 + $0x10] sm:$0xff] %v911
        %920 = vst [vmem:[%s364 + $0x18] sm:$0xff] %v912
        %921 = vst [vmem:[%s364 + $0x20] sm:$0xff] %v913
        %922 = vst [vmem:[%s364 + $0x28] sm:$0xff] %v914
        %923 = vst [vmem:[%s364 + $0x30] sm:$0xff] %v915
        %924 = vst [vmem:[%s364 + $0x38] sm:$0xff] %v916
        %s925 = sand.u32 %s225, 1
        %s926 = scalar_lea.sflag [#allocation5], %s925
        %s927 = sand.u32 %s225, 1
        %s928 = smul.addr %s927, 64
        %s929 = scalar_lea.vmem [#allocation4], %s928
        // Predicated region
        $region80: #{tpu_custom_call.1} parent=74 // pred_check
          %p930 = pneg %p235
        $region81: #{tpu_custom_call.1} parent=74 // pred_check_branch
          %932 = sbr.rel (%p930) target = $region83
        $region82: #{tpu_custom_call.1} parent=74 // pred_region
          %934 = vsyncadd %s926, 0
          %s935 = smul.addr %s23, 2
          %s936 = smul.addr %s935, 8
          %s937 = scalar_lea.hbm %s9, %s936
          %s938 = sshll.u32 %s929, 4
          %s939 = int_to_ptr.vmem [resolvable:$true] %s938
          %s940 = sshll.u32 %s937, 4
          %s941 = int_to_ptr.hbm [resolvable:$true] %s940
          %946 = dma.vmem_to_hbm [thread:$0]  %s939, 1024, %s941, %s926, 256, 512, 16
        $region83: #{tpu_custom_call.1} parent=74 // pred_fallthru
          _
      $region75: #{tpu_custom_call.1} parent=5 // pred_fallthru
        _
      %p947 = scmp.le.s32.totalorder 2, %s18
      // Predicated region
      $region84: #{tpu_custom_call.1} parent=5 // pred_check
        %p948 = pneg %p947
      $region85: #{tpu_custom_call.1} parent=5 // pred_check_branch
        %950 = sbr.rel (%p948) target = $region87
      $region86: #{tpu_custom_call.1} parent=5 // pred_region
        %s951 = ssub.s32 %s18, 2
        // Predicated region
        $region88: #{tpu_custom_call.1} parent=86 // pred_check
          %p952 = pneg %p241
        $region89: #{tpu_custom_call.1} parent=86 // pred_check_branch
          %954 = sbr.rel (%p952) target = $region91
        $region90: #{tpu_custom_call.1} parent=86 // pred_region
          %s955 = sand.u32 %s226, 1
          %s956 = scalar_lea.sflag [#allocation5], %s955
          %s957 = sand.u32 %s226, 1
          %s958 = smul.addr %s957, 64
          %s959 = scalar_lea.vmem [#allocation4], %s958
          %961 = dma.done %s956, 1024
        $region91: #{tpu_custom_call.1} parent=86 // pred_fallthru
          _
      $region87: #{tpu_custom_call.1} parent=5 // pred_fallthru
        _
    $region6: #{tpu_custom_call.1} parent=1 // loop_footer
      %s22 = sadd.s32 1, %s18
    $region7: #{tpu_custom_call.1} parent=1 // loop_footer_branch
      %17 = sbr.rel target = $region3
    $region8: #{tpu_custom_call.1} parent=1 // loop_exit
      _
    %962 = vsyncpa [#allocation5], 1
    %s963 = scalar_lea.sflag [#allocation5], 1
    %964 = vsyncpa %s963, 1

</llo_original>
